<compile_context>
chip_gen: v7x
topology: tpu7x:2x2x1
jax: 0.10.0
libtpu: 0.0.40
codegen_flags: <defaults>
</compile_context>

<pallas_src>
import jax
import jax.numpy as jnp
from jax.experimental import pallas as pl
from jax.experimental.pallas import tpu as pltpu

BN_EPS = 1e-5


def _round_up(x, m):
    return (x + m - 1) // m * m


def _choose_tk(num_genes, feat, *, batch_hint=256, tk_max=4096,
               vmem_budget_bytes=40 << 20):
    """Largest K tile (multiple of 128) whose double-buffered x/y/W1/W2
    working set fits the VMEM budget."""
    feat_v = _round_up(feat, 128)                    # lane padding inside VMEM
    tk = min(_round_up(tk_max, 128), _round_up(num_genes, 128))
    while tk > 128:
        working = 2 * (2 * batch_hint * tk * 4 + 2 * tk * feat_v * 2)
        if working <= vmem_budget_bytes:
            break
        tk = max(128, _round_up(tk // 2, 128))
    return tk


def pack_params(params, *, tk=None, batch_hint=256):
    """Pre-pack / pre-cast the weights ONCE (amortize across forward calls).

    * W1/W2 stay [K, feat] bf16 — feat is NOT padded (minimal bytes on the
      dominant HBM stream; full-last-dim blocks are contiguous DMAs).
    * K is zero-padded up to a multiple of the chosen K tile so weight blocks
      never read out of bounds.
    * domain + classifier heads are concatenated and zero-padded to 128 lanes.
    """
    w1 = jnp.asarray(params["w1"], jnp.float32)
    w2 = jnp.asarray(params["w2"], jnp.float32)
    num_genes, feat = w1.shape
    wd = jnp.asarray(params["wd"], jnp.float32)
    wc = jnp.asarray(params["wc"], jnp.float32)
    dd, nc = wd.shape[1], wc.shape[1]

    if tk is None:
        tk = _choose_tk(num_genes, feat, batch_hint=batch_hint)
    assert tk % 128 == 0, "K tile must be a multiple of 128 lanes"
    k_pad = _round_up(num_genes, tk)
    head_pad = _round_up(dd + nc, 128)

    def pad_k(w):
        return jnp.pad(w, ((0, k_pad - num_genes), (0, 0))).astype(jnp.bfloat16)

    def vec(v):
        return jnp.asarray(v, jnp.float32).reshape(1, feat)

    whead = jnp.zeros((feat, head_pad), jnp.float32)
    whead = whead.at[:, :dd].set(wd).at[:, dd:dd + nc].set(wc)
    bhead = jnp.zeros((1, head_pad), jnp.float32)
    bhead = bhead.at[0, :dd].set(jnp.asarray(params["bd"], jnp.float32).reshape(-1))
    bhead = bhead.at[0, dd:dd + nc].set(
        jnp.asarray(params["bc"], jnp.float32).reshape(-1))

    return dict(
        w1=pad_k(w1), w2=pad_k(w2),
        b1=vec(params["b1"]), b2=vec(params["b2"]),
        g1=vec(params["g1"]), g2=vec(params["g2"]),
        be1=vec(params["be1"]), be2=vec(params["be2"]),
        whead=whead.astype(jnp.bfloat16), bhead=bhead,
        num_genes=num_genes, feat=feat, dd=dd, nc=nc,
        tk=tk, k_pad=k_pad, head_pad=head_pad,
    )


def siamatt_multiome_forward(x, y, packed):
    """x, y: [B, num_genes] float32 (unpadded, uncast — streamed as-is).
    Returns (domain_x, domain_y, class_x, class_y)."""
    x = jnp.asarray(x, jnp.float32)
    y = jnp.asarray(y, jnp.float32)
    B, num_genes = x.shape
    assert num_genes == packed["num_genes"]
    feat = packed["feat"]
    dd, nc = packed["dd"], packed["nc"]
    tk, k_pad, head_pad = packed["tk"], packed["k_pad"], packed["head_pad"]
    n_k = k_pad // tk
    mask_needed = (k_pad != num_genes)   # static: only then is the last K tile partial

    def kernel(x_ref, y_ref, w1_ref, w2_ref, b1_ref, b2_ref,
               g1_ref, g2_ref, be1_ref, be2_ref, wh_ref, bh_ref,
               ox_ref, oy_ref, accx_ref, accy_ref):
        k = pl.program_id(0)

        @pl.when(k == 0)
        def _():
            accx_ref[...] = jnp.zeros_like(accx_ref)
            accy_ref[...] = jnp.zeros_like(accy_ref)

        xb = x_ref[...]
        yb = y_ref[...]
        if mask_needed:
            # Zero out-of-range columns of the (partial) last K tile so the
            # clamped-DMA garbage never reaches the accumulators.  The weight
            # pad rows are explicit zeros, so padded contributions are 0*0.
            col = k * tk + jax.lax.broadcasted_iota(jnp.int32, xb.shape, 1)
            valid = col < num_genes
            xb = jnp.where(valid, xb, 0.0)
            yb = jnp.where(valid, yb, 0.0)

        # bf16 MXU operands, f32 accumulation.  Two independent MXU streams.
        accx_ref[...] += jnp.dot(xb.astype(jnp.bfloat16), w1_ref[...],
                                 preferred_element_type=jnp.float32)
        accy_ref[...] += jnp.dot(yb.astype(jnp.bfloat16), w2_ref[...],
                                 preferred_element_type=jnp.float32)

        @pl.when(k == pl.num_programs(0) - 1)
        def _():
            wh = wh_ref[...]
            bh = bh_ref[...]

            def branch_epilogue(acc, b_row, g_row, be_row):
                # Linear bias + Tanh (f32, EUP).
                h = jnp.tanh(acc + b_row)
                # BatchNorm1d training mode: batch mean, biased variance,
                # folded into one scale/shift per feature.
                mean = jnp.mean(h, axis=0, keepdims=True)
                var = jnp.mean(jnp.square(h - mean), axis=0, keepdims=True)
                scale = g_row * jax.lax.rsqrt(var + BN_EPS)
                shift = be_row - mean * scale
                emb = h * scale + shift
                # Fused heads: one lane-dense 128-wide MXU call + unmasked store.
                return jnp.dot(emb.astype(wh.dtype), wh,
                               preferred_element_type=jnp.float32) + bh

            ox_ref[...] = branch_epilogue(accx_ref[...], b1_ref[...],
                                          g1_ref[...], be1_ref[...])
            oy_ref[...] = branch_epilogue(accy_ref[...], b2_ref[...],
                                          g2_ref[...], be2_ref[...])

    # ---- VMEM budget (tight) & cost hint ------------------------------------
    feat_v = _round_up(feat, 128)                    # lane padding of VMEM tiles
    dbl = 2                                          # double-buffered streams
    stream_bytes = dbl * (2 * B * tk * 4 + 2 * tk * feat_v * 2)
    const_bytes = 6 * 8 * feat_v * 4 + feat_v * head_pad * 2 + 8 * head_pad * 4
    out_bytes = dbl * 2 * B * head_pad * 4
    scratch_bytes = 2 * B * feat_v * 4
    vmem_bytes = int(1.25 * (stream_bytes + const_bytes + out_bytes + scratch_bytes))
    vmem_bytes = max(8 << 20, min(vmem_bytes + (2 << 20), 56 << 20))

    flops = 2 * (2 * B * k_pad * feat) + 2 * (2 * B * feat * head_pad)
    bytes_accessed = (
        2 * B * num_genes * 4                 # x, y (f32, streamed once)
        + 2 * k_pad * feat * 2                # W1, W2 (bf16)
        + feat * head_pad * 2 + head_pad * 4  # fused heads
        + 8 * feat * 4                        # biases / BN params
        + 2 * B * head_pad * 4                # outputs
    )
    cost = pl.CostEstimate(flops=flops, transcendentals=2 * B * feat,
                           bytes_accessed=bytes_accessed)

    vec_spec = pl.BlockSpec((1, feat), lambda k: (0, 0))
    out_x, out_y = pl.pallas_call(
        kernel,
        out_shape=(jax.ShapeDtypeStruct((B, head_pad), jnp.float32),
                   jax.ShapeDtypeStruct((B, head_pad), jnp.float32)),
        grid_spec=pltpu.PrefetchScalarGridSpec(
            num_scalar_prefetch=0,
            grid=(n_k,),
            in_specs=[
                pl.BlockSpec((B, tk), lambda k: (0, k)),           # x  (f32)
                pl.BlockSpec((B, tk), lambda k: (0, k)),           # y  (f32)
                pl.BlockSpec((tk, feat), lambda k: (k, 0)),        # W1 (bf16)
                pl.BlockSpec((tk, feat), lambda k: (k, 0)),        # W2 (bf16)
                vec_spec, vec_spec,                                # b1, b2
                vec_spec, vec_spec,                                # g1, g2
                vec_spec, vec_spec,                                # be1, be2
                pl.BlockSpec((feat, head_pad), lambda k: (0, 0)),  # Wd | Wc
                pl.BlockSpec((1, head_pad), lambda k: (0, 0)),     # bd | bc
            ],
            out_specs=[
                pl.BlockSpec((B, head_pad), lambda k: (0, 0)),
                pl.BlockSpec((B, head_pad), lambda k: (0, 0)),
            ],
            scratch_shapes=[pltpu.VMEM((B, feat), jnp.float32),
                            pltpu.VMEM((B, feat), jnp.float32)],
        ),
        compiler_params=pltpu.CompilerParams(
            dimension_semantics=("arbitrary",),      # K is a reduction axis
            vmem_limit_bytes=vmem_bytes,
        ),
        cost_estimate=cost,
    )(x, y, packed["w1"], packed["w2"], packed["b1"], packed["b2"],
      packed["g1"], packed["g2"], packed["be1"], packed["be2"],
      packed["whead"], packed["bhead"])

    domain_x = out_x[:, :dd]
    domain_y = out_y[:, :dd]
    class_x = out_x[:, dd:dd + nc]
    class_y = out_y[:, dd:dd + nc]
    return domain_x, domain_y, class_x, class_y


def init_params(key, num_genes, channels, domain_dim1, num_classes=22):
    feat = channels * 3
    keys = jax.random.split(key, 8)

    def linear(kw, kb, fan_in, fan_out):
        bound = 1.0 / jnp.sqrt(jnp.float32(fan_in))
        w = jax.random.uniform(kw, (fan_in, fan_out), jnp.float32, -bound, bound)
        b = jax.random.uniform(kb, (fan_out,), jnp.float32, -bound, bound)
        return w, b

    w1, b1 = linear(keys[0], keys[1], num_genes, feat)   # MLP_mod1 (x)
    w2, b2 = linear(keys[2], keys[3], num_genes, feat)   # MLP_mod2 (y)
    wc, bc = linear(keys[4], keys[5], feat, num_classes)
    wd, bd = linear(keys[6], keys[7], feat, domain_dim1)

    # BatchNorm1d defaults: gamma=1, beta=0.
    g1 = jnp.ones((feat,), jnp.float32)
    be1 = jnp.zeros((feat,), jnp.float32)
    g2 = jnp.ones((feat,), jnp.float32)
    be2 = jnp.zeros((feat,), jnp.float32)

    return dict(w1=w1, b1=b1, g1=g1, be1=be1,
                w2=w2, b2=b2, g2=g2, be2=be2,
                wc=wc, bc=bc, wd=wd, bd=bd)


def _reference_forward(x, y, p):
    """Pure-f32 JAX reference of the PyTorch training-mode forward."""
    def branch(inp, w, b, g, be):
        h = jnp.tanh(inp @ w + b)
        m = jnp.mean(h, axis=0, keepdims=True)
        v = jnp.mean((h - m) ** 2, axis=0, keepdims=True)
        return (h - m) * jax.lax.rsqrt(v + BN_EPS) * g + be

    def head(e, w, b):
        return e @ w + b

    xe = branch(x, p["w1"], p["b1"], p["g1"], p["be1"])
    ye = branch(y, p["w2"], p["b2"], p["g2"], p["be2"])
    return (head(xe, p["wd"], p["bd"]), head(ye, p["wd"], p["bd"]),
            head(xe, p["wc"], p["bc"]), head(ye, p["wc"], p["bc"]))


if __name__ == "__main__":
    # Small shapes consistent with the module's forward:
    #   batch=8, num_genes=300 (deliberately NOT a multiple of the K tile so
    #   the partial-tile masking path is exercised), channels=16 -> feat=48,
    #   domain_dim1=32, 22 classes.
    B, NUM_GENES, CHANNELS, DOMAIN_DIM1 = 8, 300, 16, 32

    key = jax.random.PRNGKey(0)
    kx, ky, kp = jax.random.split(key, 3)
    x = jax.random.normal(kx, (B, NUM_GENES), jnp.float32)
    y = jax.random.normal(ky, (B, NUM_GENES), jnp.float32)
    params = init_params(kp, NUM_GENES, CHANNELS, DOMAIN_DIM1)

    packed = pack_params(params, tk=128)   # 3 K steps; last one is partial/masked
    outs = siamatt_multiome_forward(x, y, packed)
    outs = jax.block_until_ready(outs)

    refs = _reference_forward(x, y, params)   # pure-f32 reference
    for o, r in zip(outs, refs):
        assert o.shape == r.shape, (o.shape, r.shape)
        err = float(jnp.max(jnp.abs(o - r)))
        assert err < 5e-2, f"max abs err {err}"

    print("KERNEL_OK")
</pallas_src>

<mosaic_0001>
module attributes {stable_mosaic.version = 11 : i64} {
  func.func @kernel(%arg0: i32, %arg1: memref<8x128xf32, #tpu.memory_space<vmem>>, %arg2: memref<8x128xf32, #tpu.memory_space<vmem>>, %arg3: memref<128x48xbf16, #tpu.memory_space<vmem>>, %arg4: memref<128x48xbf16, #tpu.memory_space<vmem>>, %arg5: memref<1x48xf32, #tpu.memory_space<vmem>>, %arg6: memref<1x48xf32, #tpu.memory_space<vmem>>, %arg7: memref<1x48xf32, #tpu.memory_space<vmem>>, %arg8: memref<1x48xf32, #tpu.memory_space<vmem>>, %arg9: memref<1x48xf32, #tpu.memory_space<vmem>>, %arg10: memref<1x48xf32, #tpu.memory_space<vmem>>, %arg11: memref<48x128xbf16, #tpu.memory_space<vmem>>, %arg12: memref<1x128xf32, #tpu.memory_space<vmem>>, %arg13: memref<8x128xf32, #tpu.memory_space<vmem>>, %arg14: memref<8x128xf32, #tpu.memory_space<vmem>>, %arg15: memref<8x48xf32, #tpu.memory_space<vmem>>, %arg16: memref<8x48xf32, #tpu.memory_space<vmem>>) attributes {dimension_semantics = [#tpu.dimension_semantics<arbitrary>], iteration_bounds = array<i64: 3>, scalar_prefetch = 0 : i64, scratch_operands = 2 : i64, tpu.core_type = #tpu.core_type<tc>, window_params = [{transform_indices = @transform_0, window_bounds = array<i64: 8, 128>}, {transform_indices = @transform_1, window_bounds = array<i64: 8, 128>}, {transform_indices = @transform_2, window_bounds = array<i64: 128, 48>}, {transform_indices = @transform_3, window_bounds = array<i64: 128, 48>}, {pipeline_mode = #tpu.pipeline_mode<synchronous>, transform_indices = @transform_4, window_bounds = array<i64: 1, 48>}, {pipeline_mode = #tpu.pipeline_mode<synchronous>, transform_indices = @transform_5, window_bounds = array<i64: 1, 48>}, {pipeline_mode = #tpu.pipeline_mode<synchronous>, transform_indices = @transform_6, window_bounds = array<i64: 1, 48>}, {pipeline_mode = #tpu.pipeline_mode<synchronous>, transform_indices = @transform_7, window_bounds = array<i64: 1, 48>}, {pipeline_mode = #tpu.pipeline_mode<synchronous>, transform_indices = @transform_8, window_bounds = array<i64: 1, 48>}, {pipeline_mode = #tpu.pipeline_mode<synchronous>, transform_indices = @transform_9, window_bounds = array<i64: 1, 48>}, {pipeline_mode = #tpu.pipeline_mode<synchronous>, transform_indices = @transform_10, window_bounds = array<i64: 48, 128>}, {pipeline_mode = #tpu.pipeline_mode<synchronous>, transform_indices = @transform_11, window_bounds = array<i64: 1, 128>}, {pipeline_mode = #tpu.pipeline_mode<synchronous>, transform_indices = @transform_12, window_bounds = array<i64: 8, 128>}, {pipeline_mode = #tpu.pipeline_mode<synchronous>, transform_indices = @transform_13, window_bounds = array<i64: 8, 128>}]} {
    %c0_i32 = arith.constant 0 : i32
    %0 = arith.cmpi eq, %arg0, %c0_i32 : i32
    %1 = arith.extui %0 : i1 to i32
    %c0_i32_0 = arith.constant 0 : i32
    %2 = arith.cmpi ne, %1, %c0_i32_0 : i32
    scf.if %2 {
      %cst_20 = arith.constant 0.000000e+00 : f32
      %30 = vector.broadcast %cst_20 : f32 to vector<8x48xf32>
      %c0_21 = arith.constant 0 : index
      %c0_22 = arith.constant 0 : index
      %31 = vector.load %arg15[%c0_21, %c0_22] : memref<8x48xf32, #tpu.memory_space<vmem>>, vector<8x48xf32>
      tpu.vector_store %arg15[%c0_21, %c0_22], %30 {strides = array<i32>} : memref<8x48xf32, #tpu.memory_space<vmem>>, vector<8x48xf32>,
      %cst_23 = arith.constant 0.000000e+00 : f32
      %32 = vector.broadcast %cst_23 : f32 to vector<8x48xf32>
      %c0_24 = arith.constant 0 : index
      %c0_25 = arith.constant 0 : index
      %33 = vector.load %arg16[%c0_24, %c0_25] : memref<8x48xf32, #tpu.memory_space<vmem>>, vector<8x48xf32>
      tpu.vector_store %arg16[%c0_24, %c0_25], %32 {strides = array<i32>} : memref<8x48xf32, #tpu.memory_space<vmem>>, vector<8x48xf32>,
    } else {
    }
    %c0 = arith.constant 0 : index
    %c0_1 = arith.constant 0 : index
    %3 = vector.load %arg1[%c0, %c0_1] : memref<8x128xf32, #tpu.memory_space<vmem>>, vector<8x128xf32>
    %c0_2 = arith.constant 0 : index
    %c0_3 = arith.constant 0 : index
    %4 = vector.load %arg2[%c0_2, %c0_3] : memref<8x128xf32, #tpu.memory_space<vmem>>, vector<8x128xf32>
    %c128_i32 = arith.constant 128 : i32
    %5 = arith.muli %arg0, %c128_i32 : i32
    %6 = tpu.iota {dimensions = array<i32: 1>} : vector<8x128xi32>
    %7 = vector.broadcast %5 : i32 to vector<8x128xi32>
    %8 = arith.addi %7, %6 : vector<8x128xi32>
    %c300_i32 = arith.constant 300 : i32
    %9 = vector.broadcast %c300_i32 : i32 to vector<8x128xi32>
    %10 = arith.cmpi slt, %8, %9 : vector<8x128xi32>
    %cst = arith.constant 0.000000e+00 : f32
    %11 = vector.broadcast %cst : f32 to vector<8x128xf32>
    %12 = arith.select %10, %3, %11 : vector<8x128xi1>, vector<8x128xf32>
    %cst_4 = arith.constant 0.000000e+00 : f32
    %13 = vector.broadcast %cst_4 : f32 to vector<8x128xf32>
    %14 = arith.select %10, %4, %13 : vector<8x128xi1>, vector<8x128xf32>
    %c0_5 = arith.constant 0 : index
    %c0_6 = arith.constant 0 : index
    %15 = vector.load %arg15[%c0_5, %c0_6] : memref<8x48xf32, #tpu.memory_space<vmem>>, vector<8x48xf32>
    %16 = arith.truncf %12 : vector<8x128xf32> to vector<8x128xbf16>
    %c0_7 = arith.constant 0 : index
    %c0_8 = arith.constant 0 : index
    %17 = vector.load %arg3[%c0_7, %c0_8] : memref<128x48xbf16, #tpu.memory_space<vmem>>, vector<128x48xbf16>
    %cst_9 = arith.constant dense<0.000000e+00> : vector<8x48xf32>
    %18 = tpu.matmul %16, %17, %cst_9 {dimension_numbers = #tpu.dot_dimension_numbers<[1], [0], [0], [1], [0, 0, 1, 1], [], []>} : vector<8x128xbf16>, vector<128x48xbf16>, vector<8x48xf32> -> vector<8x48xf32>
    %19 = arith.addf %15, %18 : vector<8x48xf32>
    %c0_10 = arith.constant 0 : index
    %c0_11 = arith.constant 0 : index
    %20 = vector.load %arg15[%c0_10, %c0_11] : memref<8x48xf32, #tpu.memory_space<vmem>>, vector<8x48xf32>
    tpu.vector_store %arg15[%c0_10, %c0_11], %19 {strides = array<i32>} : memref<8x48xf32, #tpu.memory_space<vmem>>, vector<8x48xf32>,
    %c0_12 = arith.constant 0 : index
    %c0_13 = arith.constant 0 : index
    %21 = vector.load %arg16[%c0_12, %c0_13] : memref<8x48xf32, #tpu.memory_space<vmem>>, vector<8x48xf32>
    %22 = arith.truncf %14 : vector<8x128xf32> to vector<8x128xbf16>
    %c0_14 = arith.constant 0 : index
    %c0_15 = arith.constant 0 : index
    %23 = vector.load %arg4[%c0_14, %c0_15] : memref<128x48xbf16, #tpu.memory_space<vmem>>, vector<128x48xbf16>
    %cst_16 = arith.constant dense<0.000000e+00> : vector<8x48xf32>
    %24 = tpu.matmul %22, %23, %cst_16 {dimension_numbers = #tpu.dot_dimension_numbers<[1], [0], [0], [1], [0, 0, 1, 1], [], []>} : vector<8x128xbf16>, vector<128x48xbf16>, vector<8x48xf32> -> vector<8x48xf32>
    %25 = arith.addf %21, %24 : vector<8x48xf32>
    %c0_17 = arith.constant 0 : index
    %c0_18 = arith.constant 0 : index
    %26 = vector.load %arg16[%c0_17, %c0_18] : memref<8x48xf32, #tpu.memory_space<vmem>>, vector<8x48xf32>
    tpu.vector_store %arg16[%c0_17, %c0_18], %25 {strides = array<i32>} : memref<8x48xf32, #tpu.memory_space<vmem>>, vector<8x48xf32>,
    %c2_i32 = arith.constant 2 : i32
    %27 = arith.cmpi eq, %arg0, %c2_i32 : i32
    %28 = arith.extui %27 : i1 to i32
    %c0_i32_19 = arith.constant 0 : i32
    %29 = arith.cmpi ne, %28, %c0_i32_19 : i32
    scf.if %29 {
      %c0_20 = arith.constant 0 : index
      %c0_21 = arith.constant 0 : index
      %30 = vector.load %arg11[%c0_20, %c0_21] : memref<48x128xbf16, #tpu.memory_space<vmem>>, vector<48x128xbf16>
      %c0_22 = arith.constant 0 : index
      %c0_23 = arith.constant 0 : index
      %31 = vector.load %arg12[%c0_22, %c0_23] : memref<1x128xf32, #tpu.memory_space<vmem>>, vector<1x128xf32>
      %c0_24 = arith.constant 0 : index
      %c0_25 = arith.constant 0 : index
      %32 = vector.load %arg15[%c0_24, %c0_25] : memref<8x48xf32, #tpu.memory_space<vmem>>, vector<8x48xf32>
      %c0_26 = arith.constant 0 : index
      %c0_27 = arith.constant 0 : index
      %33 = vector.load %arg5[%c0_26, %c0_27] : memref<1x48xf32, #tpu.memory_space<vmem>>, vector<1x48xf32>
      %c0_28 = arith.constant 0 : index
      %c0_29 = arith.constant 0 : index
      %34 = vector.load %arg7[%c0_28, %c0_29] : memref<1x48xf32, #tpu.memory_space<vmem>>, vector<1x48xf32>
      %c0_30 = arith.constant 0 : index
      %c0_31 = arith.constant 0 : index
      %35 = vector.load %arg9[%c0_30, %c0_31] : memref<1x48xf32, #tpu.memory_space<vmem>>, vector<1x48xf32>
      %36 = vector.broadcast %33 : vector<1x48xf32> to vector<8x48xf32>
      %37 = arith.addf %32, %36 : vector<8x48xf32>
      %38 = math.tanh %37 : vector<8x48xf32>
      %cst_32 = arith.constant dense<0.000000e+00> : vector<48xf32>
      %39 = vector.multi_reduction <add>, %38, %cst_32 [0] : vector<8x48xf32> to vector<48xf32>
      %40 = vector.shape_cast %39 : vector<48xf32> to vector<1x48xf32>
      %cst_33 = arith.constant 8.000000e+00 : f32
      %41 = vector.broadcast %cst_33 : f32 to vector<1x48xf32>
      %42 = arith.divf %40, %41 : vector<1x48xf32>
      %43 = vector.broadcast %42 : vector<1x48xf32> to vector<8x48xf32>
      %44 = arith.subf %38, %43 : vector<8x48xf32>
      %45 = arith.mulf %44, %44 : vector<8x48xf32>
      %cst_34 = arith.constant dense<0.000000e+00> : vector<48xf32>
      %46 = vector.multi_reduction <add>, %45, %cst_34 [0] : vector<8x48xf32> to vector<48xf32>
      %47 = vector.shape_cast %46 : vector<48xf32> to vector<1x48xf32>
      %cst_35 = arith.constant 8.000000e+00 : f32
      %48 = vector.broadcast %cst_35 : f32 to vector<1x48xf32>
      %49 = arith.divf %47, %48 : vector<1x48xf32>
      %cst_36 = arith.constant 9.99999974E-6 : f32
      %50 = vector.broadcast %cst_36 : f32 to vector<1x48xf32>
      %51 = arith.addf %49, %50 : vector<1x48xf32>
      %52 = math.rsqrt %51 : vector<1x48xf32>
      %53 = arith.mulf %34, %52 : vector<1x48xf32>
      %54 = arith.mulf %42, %53 : vector<1x48xf32>
      %55 = arith.subf %35, %54 : vector<1x48xf32>
      %56 = vector.broadcast %53 : vector<1x48xf32> to vector<8x48xf32>
      %57 = arith.mulf %38, %56 : vector<8x48xf32>
      %58 = vector.broadcast %55 : vector<1x48xf32> to vector<8x48xf32>
      %59 = arith.addf %57, %58 : vector<8x48xf32>
      %60 = arith.truncf %59 : vector<8x48xf32> to vector<8x48xbf16>
      %cst_37 = arith.constant dense<0.000000e+00> : vector<8x128xf32>
      %61 = tpu.matmul %60, %30, %cst_37 {dimension_numbers = #tpu.dot_dimension_numbers<[1], [0], [0], [1], [0, 0, 1, 1], [], []>} : vector<8x48xbf16>, vector<48x128xbf16>, vector<8x128xf32> -> vector<8x128xf32>
      %62 = vector.broadcast %31 : vector<1x128xf32> to vector<8x128xf32>
      %63 = arith.addf %61, %62 : vector<8x128xf32>
      %c0_38 = arith.constant 0 : index
      %c0_39 = arith.constant 0 : index
      %64 = vector.load %arg13[%c0_38, %c0_39] : memref<8x128xf32, #tpu.memory_space<vmem>>, vector<8x128xf32>
      tpu.vector_store %arg13[%c0_38, %c0_39], %63 {strides = array<i32>} : memref<8x128xf32, #tpu.memory_space<vmem>>, vector<8x128xf32>,
      %c0_40 = arith.constant 0 : index
      %c0_41 = arith.constant 0 : index
      %65 = vector.load %arg16[%c0_40, %c0_41] : memref<8x48xf32, #tpu.memory_space<vmem>>, vector<8x48xf32>
      %c0_42 = arith.constant 0 : index
      %c0_43 = arith.constant 0 : index
      %66 = vector.load %arg6[%c0_42, %c0_43] : memref<1x48xf32, #tpu.memory_space<vmem>>, vector<1x48xf32>
      %c0_44 = arith.constant 0 : index
      %c0_45 = arith.constant 0 : index
      %67 = vector.load %arg8[%c0_44, %c0_45] : memref<1x48xf32, #tpu.memory_space<vmem>>, vector<1x48xf32>
      %c0_46 = arith.constant 0 : index
      %c0_47 = arith.constant 0 : index
      %68 = vector.load %arg10[%c0_46, %c0_47] : memref<1x48xf32, #tpu.memory_space<vmem>>, vector<1x48xf32>
      %69 = vector.broadcast %66 : vector<1x48xf32> to vector<8x48xf32>
      %70 = arith.addf %65, %69 : vector<8x48xf32>
      %71 = math.tanh %70 : vector<8x48xf32>
      %cst_48 = arith.constant dense<0.000000e+00> : vector<48xf32>
      %72 = vector.multi_reduction <add>, %71, %cst_48 [0] : vector<8x48xf32> to vector<48xf32>
      %73 = vector.shape_cast %72 : vector<48xf32> to vector<1x48xf32>
      %cst_49 = arith.constant 8.000000e+00 : f32
      %74 = vector.broadcast %cst_49 : f32 to vector<1x48xf32>
      %75 = arith.divf %73, %74 : vector<1x48xf32>
      %76 = vector.broadcast %75 : vector<1x48xf32> to vector<8x48xf32>
      %77 = arith.subf %71, %76 : vector<8x48xf32>
      %78 = arith.mulf %77, %77 : vector<8x48xf32>
      %cst_50 = arith.constant dense<0.000000e+00> : vector<48xf32>
      %79 = vector.multi_reduction <add>, %78, %cst_50 [0] : vector<8x48xf32> to vector<48xf32>
      %80 = vector.shape_cast %79 : vector<48xf32> to vector<1x48xf32>
      %cst_51 = arith.constant 8.000000e+00 : f32
      %81 = vector.broadcast %cst_51 : f32 to vector<1x48xf32>
      %82 = arith.divf %80, %81 : vector<1x48xf32>
      %cst_52 = arith.constant 9.99999974E-6 : f32
      %83 = vector.broadcast %cst_52 : f32 to vector<1x48xf32>
      %84 = arith.addf %82, %83 : vector<1x48xf32>
      %85 = math.rsqrt %84 : vector<1x48xf32>
      %86 = arith.mulf %67, %85 : vector<1x48xf32>
      %87 = arith.mulf %75, %86 : vector<1x48xf32>
      %88 = arith.subf %68, %87 : vector<1x48xf32>
      %89 = vector.broadcast %86 : vector<1x48xf32> to vector<8x48xf32>
      %90 = arith.mulf %71, %89 : vector<8x48xf32>
      %91 = vector.broadcast %88 : vector<1x48xf32> to vector<8x48xf32>
      %92 = arith.addf %90, %91 : vector<8x48xf32>
      %93 = arith.truncf %92 : vector<8x48xf32> to vector<8x48xbf16>
      %cst_53 = arith.constant dense<0.000000e+00> : vector<8x128xf32>
      %94 = tpu.matmul %93, %30, %cst_53 {dimension_numbers = #tpu.dot_dimension_numbers<[1], [0], [0], [1], [0, 0, 1, 1], [], []>} : vector<8x48xbf16>, vector<48x128xbf16>, vector<8x128xf32> -> vector<8x128xf32>
      %95 = vector.broadcast %31 : vector<1x128xf32> to vector<8x128xf32>
      %96 = arith.addf %94, %95 : vector<8x128xf32>
      %c0_54 = arith.constant 0 : index
      %c0_55 = arith.constant 0 : index
      %97 = vector.load %arg14[%c0_54, %c0_55] : memref<8x128xf32, #tpu.memory_space<vmem>>, vector<8x128xf32>
      tpu.vector_store %arg14[%c0_54, %c0_55], %96 {strides = array<i32>} : memref<8x128xf32, #tpu.memory_space<vmem>>, vector<8x128xf32>,
    } else {
    }
    return
  }
  func.func @transform_0(%arg0: i32) -> (i32, i32) {
    %c0_i32 = arith.constant 0 : i32
    %c0_i32_0 = arith.constant 0 : i32
    return %c0_i32, %arg0 : i32, i32
  }
  func.func @transform_1(%arg0: i32) -> (i32, i32) {
    %c0_i32 = arith.constant 0 : i32
    %c0_i32_0 = arith.constant 0 : i32
    return %c0_i32, %arg0 : i32, i32
  }
  func.func @transform_2(%arg0: i32) -> (i32, i32) {
    %c0_i32 = arith.constant 0 : i32
    %c0_i32_0 = arith.constant 0 : i32
    return %arg0, %c0_i32 : i32, i32
  }
  func.func @transform_3(%arg0: i32) -> (i32, i32) {
    %c0_i32 = arith.constant 0 : i32
    %c0_i32_0 = arith.constant 0 : i32
    return %arg0, %c0_i32 : i32, i32
  }
  func.func @transform_4(%arg0: i32) -> (i32, i32) {
    %c0_i32 = arith.constant 0 : i32
    %c0_i32_0 = arith.constant 0 : i32
    %c0_i32_1 = arith.constant 0 : i32
    return %c0_i32, %c0_i32_0 : i32, i32
  }
  func.func @transform_5(%arg0: i32) -> (i32, i32) {
    %c0_i32 = arith.constant 0 : i32
    %c0_i32_0 = arith.constant 0 : i32
    %c0_i32_1 = arith.constant 0 : i32
    return %c0_i32, %c0_i32_0 : i32, i32
  }
  func.func @transform_6(%arg0: i32) -> (i32, i32) {
    %c0_i32 = arith.constant 0 : i32
    %c0_i32_0 = arith.constant 0 : i32
    %c0_i32_1 = arith.constant 0 : i32
    return %c0_i32, %c0_i32_0 : i32, i32
  }
  func.func @transform_7(%arg0: i32) -> (i32, i32) {
    %c0_i32 = arith.constant 0 : i32
    %c0_i32_0 = arith.constant 0 : i32
    %c0_i32_1 = arith.constant 0 : i32
    return %c0_i32, %c0_i32_0 : i32, i32
  }
  func.func @transform_8(%arg0: i32) -> (i32, i32) {
    %c0_i32 = arith.constant 0 : i32
    %c0_i32_0 = arith.constant 0 : i32
    %c0_i32_1 = arith.constant 0 : i32
    return %c0_i32, %c0_i32_0 : i32, i32
  }
  func.func @transform_9(%arg0: i32) -> (i32, i32) {
    %c0_i32 = arith.constant 0 : i32
    %c0_i32_0 = arith.constant 0 : i32
    %c0_i32_1 = arith.constant 0 : i32
    return %c0_i32, %c0_i32_0 : i32, i32
  }
  func.func @transform_10(%arg0: i32) -> (i32, i32) {
    %c0_i32 = arith.constant 0 : i32
    %c0_i32_0 = arith.constant 0 : i32
    %c0_i32_1 = arith.constant 0 : i32
    return %c0_i32, %c0_i32_0 : i32, i32
  }
  func.func @transform_11(%arg0: i32) -> (i32, i32) {
    %c0_i32 = arith.constant 0 : i32
    %c0_i32_0 = arith.constant 0 : i32
    %c0_i32_1 = arith.constant 0 : i32
    return %c0_i32, %c0_i32_0 : i32, i32
  }
  func.func @transform_12(%arg0: i32) -> (i32, i32) {
    %c0_i32 = arith.constant 0 : i32
    %c0_i32_0 = arith.constant 0 : i32
    %c0_i32_1 = arith.constant 0 : i32
    return %c0_i32, %c0_i32_0 : i32, i32
  }
  func.func @transform_13(%arg0: i32) -> (i32, i32) {
    %c0_i32 = arith.constant 0 : i32
    %c0_i32_0 = arith.constant 0 : i32
    %c0_i32_1 = arith.constant 0 : i32
    return %c0_i32, %c0_i32_0 : i32, i32
  }
}

</mosaic_0001>

<llo_original>
// kernel: tpu_custom_call.1
$region0: #{tpu_custom_call.1}
  #allocation0 [shape = 'u32[]', space=smem, size = 0x4, offset = 0x4, fixed_abs, tag = 'smem constant byte address 0x4 - core index']
  #allocation1 [shape = 'u32[144,128]{1,0:T(1,128)}', space=vmem, size = 0x12000, scoped, tag = 'internal scratch']
  #allocation2 [shape = 'f32[8,48]{1,0:T(8,128)}', space=vmem, size = 0x1000, scoped, tag = 'scratch operand']
  #allocation3 [shape = 'f32[8,48]{1,0:T(8,128)}', space=vmem, size = 0x1000, scoped, tag = 'scratch operand']
  %s0 = inlined_call_operand.vmem [shape: f32[8,300], index: 0, kind: input, shape index: {}]
  %s1 = inlined_call_operand.vmem [shape: f32[8,300], index: 1, kind: input, shape index: {}]
  %s2 = inlined_call_operand.vmem [shape: bf16[384,48], index: 2, kind: input, shape index: {}]
  %s3 = inlined_call_operand.vmem [shape: bf16[384,48], index: 3, kind: input, shape index: {}]
  %s4 = inlined_call_operand.vmem [shape: f32[1,48], index: 4, kind: input, shape index: {}]
  %s5 = inlined_call_operand.vmem [shape: f32[1,48], index: 5, kind: input, shape index: {}]
  %s6 = inlined_call_operand.vmem [shape: f32[1,48], index: 6, kind: input, shape index: {}]
  %s7 = inlined_call_operand.vmem [shape: f32[1,48], index: 7, kind: input, shape index: {}]
  %s8 = inlined_call_operand.vmem [shape: f32[1,48], index: 8, kind: input, shape index: {}]
  %s9 = inlined_call_operand.vmem [shape: f32[1,48], index: 9, kind: input, shape index: {}]
  %s10 = inlined_call_operand.vmem [shape: bf16[48,128], index: 10, kind: input, shape index: {}]
  %s11 = inlined_call_operand.vmem [shape: f32[1,128], index: 11, kind: input, shape index: {}]
  %s12 = inlined_call_operand.hbm [shape: f32[8,128], index: 12, kind: output, shape index: {0}]
  %s13 = inlined_call_operand.hbm [shape: f32[8,128], index: 13, kind: output, shape index: {1}]
  %14 = xla_tuple %s12, %s13
  %s15 = sld [smem:[#allocation0]]
  $region97: #{tpu_custom_call.1} parent=0
    _
  %s17 = ssub.s32 1, %s15
  %s18 = scalar_select 0, %s17, %s15
  $region1: #{tpu_custom_call.1} parent=0
    #allocation4 [shape = 'u8[4096]{0}', space=vmem, size = 0x1000, scoped, tag = 'output window, operand 0, single buffered']
    #allocation5 [shape = 's32[2]{0}', space=sflag, size = 0x8, scoped, tag = 'scoped memory for tpu_custom_call.1']
    #allocation6 [shape = 'u8[4096]{0}', space=vmem, size = 0x1000, scoped, tag = 'output window, operand 1, single buffered']
    #allocation7 [shape = 's32[1]{0}', space=sflag, size = 0x4, scoped, tag = 'scoped memory for tpu_custom_call.1']
    %19 = vsyncpa [#allocation5], 0
    %20 = vsyncpa [#allocation7], 0
    loop: start=0, step=1, limit=5
    $region2: #{tpu_custom_call.1} parent=1 // loop_pre_header
      _
    $region3: #{tpu_custom_call.1} parent=1 // loop_header
      %s22 = sphi 0, %s26
      %p23 = scmp.ge.s32.totalorder %s22, 5
      %s32 = sphi 0, %s34
      %s35 = sphi 0, %s32
      %s36 = sphi 0, %s35
      %s52 = sphi 0, %s36
      %s58 = sphi 0, %s60
      %s61 = sphi 0, %s58
      %s62 = sphi 0, %s61
      %s78 = sphi 0, %s62
      %s84 = sphi 0, %s86
      %s87 = sphi 0, %s84
      %s88 = sphi 0, %s87
      %s104 = sphi 0, %s88
      %s110 = sphi 0, %s112
      %s113 = sphi 0, %s110
      %s114 = sphi 0, %s113
      %s130 = sphi 0, %s114
      %s134 = sphi 0, %s134
      %s136 = sphi 0, %s134
      %s137 = sphi 0, %s136
      %s151 = sphi 0, %s137
      %s155 = sphi 0, %s155
      %s157 = sphi 0, %s155
      %s158 = sphi 0, %s157
      %s172 = sphi 0, %s158
      %s176 = sphi 0, %s176
      %s178 = sphi 0, %s176
      %s179 = sphi 0, %s178
      %s193 = sphi 0, %s179
      %s197 = sphi 0, %s197
      %s199 = sphi 0, %s197
      %s200 = sphi 0, %s199
      %s214 = sphi 0, %s200
      %s218 = sphi 0, %s218
      %s220 = sphi 0, %s218
      %s221 = sphi 0, %s220
      %s235 = sphi 0, %s221
      %s239 = sphi 0, %s239
      %s241 = sphi 0, %s239
      %s242 = sphi 0, %s241
      %s256 = sphi 0, %s242
      %s260 = sphi 0, %s260
      %s262 = sphi 0, %s260
      %s263 = sphi 0, %s262
      %s277 = sphi 0, %s263
      %s281 = sphi 0, %s281
      %s283 = sphi 0, %s281
      %s284 = sphi 0, %s283
      %s298 = sphi 0, %s284
      %s302 = sphi 0, %s302
      %s304 = sphi 0, %s302
      %s305 = sphi 0, %s304
      %s319 = sphi 0, %s305
      %s323 = sphi 0, %s323
      %s325 = sphi 0, %s323
      %s326 = sphi 0, %s325
      %s340 = sphi 0, %s326
    $region4: #{tpu_custom_call.1} parent=1 // loop_header_branch
      %25 = sbr.rel (%p23) target = $region8
    $region5: #{tpu_custom_call.1} parent=1 // loop_body
      %s27 = ssub.s32 %s22, 1
      %s28 = ssub.s32 %s22, 2
      %s29 = sadd.s32 %s22, 1
      %s30 = ssub.s32 %s22, %s29
      %p31 = scmp.eq.s32.totalorder %s30, 0
      %s33 = sadd.s32 %s32, 1
      %s34 = scalar_select %p31, %s32, %s33
      %p37 = pneg %p31
      %p38 = scmp.eq.s32.totalorder %s22, 2
      %p39 = por %p37, %p38
      %p40 = scmp.ne.s32.totalorder %s32, %s35
      %p41 = scmp.eq.s32.totalorder %s22, 0
      %p42 = por %p40, %p41
      %p43 = scmp.ne.s32.totalorder %s32, %s35
      %p44 = scmp.eq.s32.totalorder %s27, 2
      %p45 = por %p43, %p44
      %p46 = scmp.ne.s32.totalorder %s35, %s36
      %p47 = scmp.eq.s32.totalorder %s27, 0
      %p48 = por %p46, %p47
      %p49 = scmp.ne.s32.totalorder %s35, %s36
      %p50 = scmp.eq.s32.totalorder %s28, 2
      %p51 = por %p49, %p50
      %p53 = scmp.ne.s32.totalorder %s36, %s52
      %p54 = scmp.eq.s32.totalorder %s28, 0
      %p55 = por %p53, %p54
      %s56 = ssub.s32 %s22, %s29
      %p57 = scmp.eq.s32.totalorder %s56, 0
      %s59 = sadd.s32 %s58, 1
      %s60 = scalar_select %p57, %s58, %s59
      %p63 = pneg %p57
      %p64 = scmp.eq.s32.totalorder %s22, 2
      %p65 = por %p63, %p64
      %p66 = scmp.ne.s32.totalorder %s58, %s61
      %p67 = scmp.eq.s32.totalorder %s22, 0
      %p68 = por %p66, %p67
      %p69 = scmp.ne.s32.totalorder %s58, %s61
      %p70 = scmp.eq.s32.totalorder %s27, 2
      %p71 = por %p69, %p70
      %p72 = scmp.ne.s32.totalorder %s61, %s62
      %p73 = scmp.eq.s32.totalorder %s27, 0
      %p74 = por %p72, %p73
      %p75 = scmp.ne.s32.totalorder %s61, %s62
      %p76 = scmp.eq.s32.totalorder %s28, 2
      %p77 = por %p75, %p76
      %p79 = scmp.ne.s32.totalorder %s62, %s78
      %p80 = scmp.eq.s32.totalorder %s28, 0
      %p81 = por %p79, %p80
      %s82 = ssub.s32 %s22, %s29
      %p83 = scmp.eq.s32.totalorder %s82, 0
      %s85 = sadd.s32 %s84, 1
      %s86 = scalar_select %p83, %s84, %s85
      %p89 = pneg %p83
      %p90 = scmp.eq.s32.totalorder %s22, 2
      %p91 = por %p89, %p90
      %p92 = scmp.ne.s32.totalorder %s84, %s87
      %p93 = scmp.eq.s32.totalorder %s22, 0
      %p94 = por %p92, %p93
      %p95 = scmp.ne.s32.totalorder %s84, %s87
      %p96 = scmp.eq.s32.totalorder %s27, 2
      %p97 = por %p95, %p96
      %p98 = scmp.ne.s32.totalorder %s87, %s88
      %p99 = scmp.eq.s32.totalorder %s27, 0
      %p100 = por %p98, %p99
      %p101 = scmp.ne.s32.totalorder %s87, %s88
      %p102 = scmp.eq.s32.totalorder %s28, 2
      %p103 = por %p101, %p102
      %p105 = scmp.ne.s32.totalorder %s88, %s104
      %p106 = scmp.eq.s32.totalorder %s28, 0
      %p107 = por %p105, %p106
      %s108 = ssub.s32 %s22, %s29
      %p109 = scmp.eq.s32.totalorder %s108, 0
      %s111 = sadd.s32 %s110, 1
      %s112 = scalar_select %p109, %s110, %s111
      %p115 = pneg %p109
      %p116 = scmp.eq.s32.totalorder %s22, 2
      %p117 = por %p115, %p116
      %p118 = scmp.ne.s32.totalorder %s110, %s113
      %p119 = scmp.eq.s32.totalorder %s22, 0
      %p120 = por %p118, %p119
      %p121 = scmp.ne.s32.totalorder %s110, %s113
      %p122 = scmp.eq.s32.totalorder %s27, 2
      %p123 = por %p121, %p122
      %p124 = scmp.ne.s32.totalorder %s113, %s114
      %p125 = scmp.eq.s32.totalorder %s27, 0
      %p126 = por %p124, %p125
      %p127 = scmp.ne.s32.totalorder %s113, %s114
      %p128 = scmp.eq.s32.totalorder %s28, 2
      %p129 = por %p127, %p128
      %p131 = scmp.ne.s32.totalorder %s114, %s130
      %p132 = scmp.eq.s32.totalorder %s28, 0
      %p133 = por %p131, %p132
      %s135 = sadd.s32 %s134, 1
      %p138 = scmp.eq.s32.totalorder %s22, 2
      %p139 = scmp.ne.s32.totalorder %s134, %s136
      %p140 = scmp.eq.s32.totalorder %s22, 0
      %p141 = por %p139, %p140
      %p142 = scmp.ne.s32.totalorder %s134, %s136
      %p143 = scmp.eq.s32.totalorder %s27, 2
      %p144 = por %p142, %p143
      %p145 = scmp.ne.s32.totalorder %s136, %s137
      %p146 = scmp.eq.s32.totalorder %s27, 0
      %p147 = por %p145, %p146
      %p148 = scmp.ne.s32.totalorder %s136, %s137
      %p149 = scmp.eq.s32.totalorder %s28, 2
      %p150 = por %p148, %p149
      %p152 = scmp.ne.s32.totalorder %s137, %s151
      %p153 = scmp.eq.s32.totalorder %s28, 0
      %p154 = por %p152, %p153
      %s156 = sadd.s32 %s155, 1
      %p159 = scmp.eq.s32.totalorder %s22, 2
      %p160 = scmp.ne.s32.totalorder %s155, %s157
      %p161 = scmp.eq.s32.totalorder %s22, 0
      %p162 = por %p160, %p161
      %p163 = scmp.ne.s32.totalorder %s155, %s157
      %p164 = scmp.eq.s32.totalorder %s27, 2
      %p165 = por %p163, %p164
      %p166 = scmp.ne.s32.totalorder %s157, %s158
      %p167 = scmp.eq.s32.totalorder %s27, 0
      %p168 = por %p166, %p167
      %p169 = scmp.ne.s32.totalorder %s157, %s158
      %p170 = scmp.eq.s32.totalorder %s28, 2
      %p171 = por %p169, %p170
      %p173 = scmp.ne.s32.totalorder %s158, %s172
      %p174 = scmp.eq.s32.totalorder %s28, 0
      %p175 = por %p173, %p174
      %s177 = sadd.s32 %s176, 1
      %p180 = scmp.eq.s32.totalorder %s22, 2
      %p181 = scmp.ne.s32.totalorder %s176, %s178
      %p182 = scmp.eq.s32.totalorder %s22, 0
      %p183 = por %p181, %p182
      %p184 = scmp.ne.s32.totalorder %s176, %s178
      %p185 = scmp.eq.s32.totalorder %s27, 2
      %p186 = por %p184, %p185
      %p187 = scmp.ne.s32.totalorder %s178, %s179
      %p188 = scmp.eq.s32.totalorder %s27, 0
      %p189 = por %p187, %p188
      %p190 = scmp.ne.s32.totalorder %s178, %s179
      %p191 = scmp.eq.s32.totalorder %s28, 2
      %p192 = por %p190, %p191
      %p194 = scmp.ne.s32.totalorder %s179, %s193
      %p195 = scmp.eq.s32.totalorder %s28, 0
      %p196 = por %p194, %p195
      %s198 = sadd.s32 %s197, 1
      %p201 = scmp.eq.s32.totalorder %s22, 2
      %p202 = scmp.ne.s32.totalorder %s197, %s199
      %p203 = scmp.eq.s32.totalorder %s22, 0
      %p204 = por %p202, %p203
      %p205 = scmp.ne.s32.totalorder %s197, %s199
      %p206 = scmp.eq.s32.totalorder %s27, 2
      %p207 = por %p205, %p206
      %p208 = scmp.ne.s32.totalorder %s199, %s200
      %p209 = scmp.eq.s32.totalorder %s27, 0
      %p210 = por %p208, %p209
      %p211 = scmp.ne.s32.totalorder %s199, %s200
      %p212 = scmp.eq.s32.totalorder %s28, 2
      %p213 = por %p211, %p212
      %p215 = scmp.ne.s32.totalorder %s200, %s214
      %p216 = scmp.eq.s32.totalorder %s28, 0
      %p217 = por %p215, %p216
      %s219 = sadd.s32 %s218, 1
      %p222 = scmp.eq.s32.totalorder %s22, 2
      %p223 = scmp.ne.s32.totalorder %s218, %s220
      %p224 = scmp.eq.s32.totalorder %s22, 0
      %p225 = por %p223, %p224
      %p226 = scmp.ne.s32.totalorder %s218, %s220
      %p227 = scmp.eq.s32.totalorder %s27, 2
      %p228 = por %p226, %p227
      %p229 = scmp.ne.s32.totalorder %s220, %s221
      %p230 = scmp.eq.s32.totalorder %s27, 0
      %p231 = por %p229, %p230
      %p232 = scmp.ne.s32.totalorder %s220, %s221
      %p233 = scmp.eq.s32.totalorder %s28, 2
      %p234 = por %p232, %p233
      %p236 = scmp.ne.s32.totalorder %s221, %s235
      %p237 = scmp.eq.s32.totalorder %s28, 0
      %p238 = por %p236, %p237
      %s240 = sadd.s32 %s239, 1
      %p243 = scmp.eq.s32.totalorder %s22, 2
      %p244 = scmp.ne.s32.totalorder %s239, %s241
      %p245 = scmp.eq.s32.totalorder %s22, 0
      %p246 = por %p244, %p245
      %p247 = scmp.ne.s32.totalorder %s239, %s241
      %p248 = scmp.eq.s32.totalorder %s27, 2
      %p249 = por %p247, %p248
      %p250 = scmp.ne.s32.totalorder %s241, %s242
      %p251 = scmp.eq.s32.totalorder %s27, 0
      %p252 = por %p250, %p251
      %p253 = scmp.ne.s32.totalorder %s241, %s242
      %p254 = scmp.eq.s32.totalorder %s28, 2
      %p255 = por %p253, %p254
      %p257 = scmp.ne.s32.totalorder %s242, %s256
      %p258 = scmp.eq.s32.totalorder %s28, 0
      %p259 = por %p257, %p258
      %s261 = sadd.s32 %s260, 1
      %p264 = scmp.eq.s32.totalorder %s22, 2
      %p265 = scmp.ne.s32.totalorder %s260, %s262
      %p266 = scmp.eq.s32.totalorder %s22, 0
      %p267 = por %p265, %p266
      %p268 = scmp.ne.s32.totalorder %s260, %s262
      %p269 = scmp.eq.s32.totalorder %s27, 2
      %p270 = por %p268, %p269
      %p271 = scmp.ne.s32.totalorder %s262, %s263
      %p272 = scmp.eq.s32.totalorder %s27, 0
      %p273 = por %p271, %p272
      %p274 = scmp.ne.s32.totalorder %s262, %s263
      %p275 = scmp.eq.s32.totalorder %s28, 2
      %p276 = por %p274, %p275
      %p278 = scmp.ne.s32.totalorder %s263, %s277
      %p279 = scmp.eq.s32.totalorder %s28, 0
      %p280 = por %p278, %p279
      %s282 = sadd.s32 %s281, 1
      %p285 = scmp.eq.s32.totalorder %s22, 2
      %p286 = scmp.ne.s32.totalorder %s281, %s283
      %p287 = scmp.eq.s32.totalorder %s22, 0
      %p288 = por %p286, %p287
      %p289 = scmp.ne.s32.totalorder %s281, %s283
      %p290 = scmp.eq.s32.totalorder %s27, 2
      %p291 = por %p289, %p290
      %p292 = scmp.ne.s32.totalorder %s283, %s284
      %p293 = scmp.eq.s32.totalorder %s27, 0
      %p294 = por %p292, %p293
      %p295 = scmp.ne.s32.totalorder %s283, %s284
      %p296 = scmp.eq.s32.totalorder %s28, 2
      %p297 = por %p295, %p296
      %p299 = scmp.ne.s32.totalorder %s284, %s298
      %p300 = scmp.eq.s32.totalorder %s28, 0
      %p301 = por %p299, %p300
      %s303 = sadd.s32 %s302, 1
      %p306 = scmp.eq.s32.totalorder %s22, 2
      %p307 = scmp.ne.s32.totalorder %s302, %s304
      %p308 = scmp.eq.s32.totalorder %s22, 0
      %p309 = por %p307, %p308
      %p310 = scmp.ne.s32.totalorder %s302, %s304
      %p311 = scmp.eq.s32.totalorder %s27, 2
      %p312 = por %p310, %p311
      %p313 = scmp.ne.s32.totalorder %s304, %s305
      %p314 = scmp.eq.s32.totalorder %s27, 0
      %p315 = por %p313, %p314
      %p316 = scmp.ne.s32.totalorder %s304, %s305
      %p317 = scmp.eq.s32.totalorder %s28, 2
      %p318 = por %p316, %p317
      %p320 = scmp.ne.s32.totalorder %s305, %s319
      %p321 = scmp.eq.s32.totalorder %s28, 0
      %p322 = por %p320, %p321
      %s324 = sadd.s32 %s323, 1
      %p327 = scmp.eq.s32.totalorder %s22, 2
      %p328 = scmp.ne.s32.totalorder %s323, %s325
      %p329 = scmp.eq.s32.totalorder %s22, 0
      %p330 = por %p328, %p329
      %p331 = scmp.ne.s32.totalorder %s323, %s325
      %p332 = scmp.eq.s32.totalorder %s27, 2
      %p333 = por %p331, %p332
      %p334 = scmp.ne.s32.totalorder %s325, %s326
      %p335 = scmp.eq.s32.totalorder %s27, 0
      %p336 = por %p334, %p335
      %p337 = scmp.ne.s32.totalorder %s325, %s326
      %p338 = scmp.eq.s32.totalorder %s28, 2
      %p339 = por %p337, %p338
      %p341 = scmp.ne.s32.totalorder %s326, %s340
      %p342 = scmp.eq.s32.totalorder %s28, 0
      %p343 = por %p341, %p342
      %p344 = scmp.le.s32.totalorder 1, %s22
      %p345 = scmp.lt.s32.totalorder %s22, 4
      %p346 = pnand %p344, %p345
      %p347 = pneg %p346
      // Predicated region
      $region9: #{tpu_custom_call.1} parent=5 // pred_check
        _
      $region10: #{tpu_custom_call.1} parent=5 // pred_check_branch
        %349 = sbr.rel (%p346) target = $region12
      $region11: #{tpu_custom_call.1} parent=5 // pred_region
        %s350 = ssub.s32 %s22, 1
        // Predicated region
        $region13: #{tpu_custom_call.1} parent=11 // pred_check
          %p351 = pneg %p147
        $region14: #{tpu_custom_call.1} parent=11 // pred_check_branch
          %353 = sbr.rel (%p351) target = $region16
        $region15: #{tpu_custom_call.1} parent=11 // pred_region
          _
        $region16: #{tpu_custom_call.1} parent=11 // pred_fallthru
          _
        // Predicated region
        $region17: #{tpu_custom_call.1} parent=11 // pred_check
          %p354 = pneg %p168
        $region18: #{tpu_custom_call.1} parent=11 // pred_check_branch
          %356 = sbr.rel (%p354) target = $region20
        $region19: #{tpu_custom_call.1} parent=11 // pred_region
          _
        $region20: #{tpu_custom_call.1} parent=11 // pred_fallthru
          _
        // Predicated region
        $region21: #{tpu_custom_call.1} parent=11 // pred_check
          %p357 = pneg %p189
        $region22: #{tpu_custom_call.1} parent=11 // pred_check_branch
          %359 = sbr.rel (%p357) target = $region24
        $region23: #{tpu_custom_call.1} parent=11 // pred_region
          _
        $region24: #{tpu_custom_call.1} parent=11 // pred_fallthru
          _
        // Predicated region
        $region25: #{tpu_custom_call.1} parent=11 // pred_check
          %p360 = pneg %p210
        $region26: #{tpu_custom_call.1} parent=11 // pred_check_branch
          %362 = sbr.rel (%p360) target = $region28
        $region27: #{tpu_custom_call.1} parent=11 // pred_region
          _
        $region28: #{tpu_custom_call.1} parent=11 // pred_fallthru
          _
        // Predicated region
        $region29: #{tpu_custom_call.1} parent=11 // pred_check
          %p363 = pneg %p231
        $region30: #{tpu_custom_call.1} parent=11 // pred_check_branch
          %365 = sbr.rel (%p363) target = $region32
        $region31: #{tpu_custom_call.1} parent=11 // pred_region
          _
        $region32: #{tpu_custom_call.1} parent=11 // pred_fallthru
          _
        // Predicated region
        $region33: #{tpu_custom_call.1} parent=11 // pred_check
          %p366 = pneg %p252
        $region34: #{tpu_custom_call.1} parent=11 // pred_check_branch
          %368 = sbr.rel (%p366) target = $region36
        $region35: #{tpu_custom_call.1} parent=11 // pred_region
          _
        $region36: #{tpu_custom_call.1} parent=11 // pred_fallthru
          _
        // Predicated region
        $region37: #{tpu_custom_call.1} parent=11 // pred_check
          %p369 = pneg %p273
        $region38: #{tpu_custom_call.1} parent=11 // pred_check_branch
          %371 = sbr.rel (%p369) target = $region40
        $region39: #{tpu_custom_call.1} parent=11 // pred_region
          _
        $region40: #{tpu_custom_call.1} parent=11 // pred_fallthru
          _
        // Predicated region
        $region41: #{tpu_custom_call.1} parent=11 // pred_check
          %p372 = pneg %p294
        $region42: #{tpu_custom_call.1} parent=11 // pred_check_branch
          %374 = sbr.rel (%p372) target = $region44
        $region43: #{tpu_custom_call.1} parent=11 // pred_region
          _
        $region44: #{tpu_custom_call.1} parent=11 // pred_fallthru
          _
      $region12: #{tpu_custom_call.1} parent=5 // pred_fallthru
        _
      %p375 = scmp.lt.s32.totalorder %s22, 3
      // Predicated region
      $region45: #{tpu_custom_call.1} parent=5 // pred_check
        %p376 = pneg %p375
      $region46: #{tpu_custom_call.1} parent=5 // pred_check_branch
        %378 = sbr.rel (%p376) target = $region48
      $region47: #{tpu_custom_call.1} parent=5 // pred_region
        // Predicated region
        $region49: #{tpu_custom_call.1} parent=47 // pred_check
          %p379 = pneg %p42
        $region50: #{tpu_custom_call.1} parent=47 // pred_check_branch
          %381 = sbr.rel (%p379) target = $region52
        $region51: #{tpu_custom_call.1} parent=47 // pred_region
          %p382 = scmp.lt.s32.totalorder %s22, 2
          %s383 = scalar_select %p382, %s22, 2
          %s384 = smul.addr %s383, 8
          %s385 = scalar_lea.vmem %s0, %s384
        $region52: #{tpu_custom_call.1} parent=47 // pred_fallthru
          _
        // Predicated region
        $region53: #{tpu_custom_call.1} parent=47 // pred_check
          %p386 = pneg %p68
        $region54: #{tpu_custom_call.1} parent=47 // pred_check_branch
          %388 = sbr.rel (%p386) target = $region56
        $region55: #{tpu_custom_call.1} parent=47 // pred_region
          %p389 = scmp.lt.s32.totalorder %s22, 2
          %s390 = scalar_select %p389, %s22, 2
          %s391 = smul.addr %s390, 8
          %s392 = scalar_lea.vmem %s1, %s391
        $region56: #{tpu_custom_call.1} parent=47 // pred_fallthru
          _
        // Predicated region
        $region57: #{tpu_custom_call.1} parent=47 // pred_check
          %p393 = pneg %p94
        $region58: #{tpu_custom_call.1} parent=47 // pred_check_branch
          %395 = sbr.rel (%p393) target = $region60
        $region59: #{tpu_custom_call.1} parent=47 // pred_region
          %s396 = smul.u32 16, %s22
          %p397 = scmp.lt.s32.totalorder %s396, 47
          %s398 = scalar_select %p397, %s396, 47
          %s399 = smul.addr %s398, 4
          %s400 = scalar_lea.vmem %s2, %s399
          %s401 = smul.u32 16, %s22
        $region60: #{tpu_custom_call.1} parent=47 // pred_fallthru
          _
        // Predicated region
        $region61: #{tpu_custom_call.1} parent=47 // pred_check
          %p402 = pneg %p120
        $region62: #{tpu_custom_call.1} parent=47 // pred_check_branch
          %404 = sbr.rel (%p402) target = $region64
        $region63: #{tpu_custom_call.1} parent=47 // pred_region
          %s405 = smul.u32 16, %s22
          %p406 = scmp.lt.s32.totalorder %s405, 47
          %s407 = scalar_select %p406, %s405, 47
          %s408 = smul.addr %s407, 4
          %s409 = scalar_lea.vmem %s3, %s408
          %s410 = smul.u32 16, %s22
        $region64: #{tpu_custom_call.1} parent=47 // pred_fallthru
          _
      $region48: #{tpu_custom_call.1} parent=5 // pred_fallthru
        _
      %p411 = scmp.le.s32.totalorder 1, %s22
      %p412 = scmp.lt.s32.totalorder %s22, 4
      %p413 = pnand %p411, %p412
      %p414 = pneg %p413
      // Predicated region
      $region65: #{tpu_custom_call.1} parent=5 // pred_check
        _
      $region66: #{tpu_custom_call.1} parent=5 // pred_check_branch
        %416 = sbr.rel (%p413) target = $region68
      $region67: #{tpu_custom_call.1} parent=5 // pred_region
        %s417 = ssub.s32 %s22, 1
        %p418 = scmp.lt.s32.totalorder %s27, 2
        %s419 = scalar_select %p418, %s27, 2
        %s420 = smul.addr %s419, 8
        %s421 = scalar_lea.vmem %s0, %s420
        %p422 = pneg %p48
        %p423 = pneg %p45
        %p424 = scmp.lt.s32.totalorder %s27, 2
        %s425 = scalar_select %p424, %s27, 2
        %s426 = smul.addr %s425, 8
        %s427 = scalar_lea.vmem %s1, %s426
        %p428 = pneg %p74
        %p429 = pneg %p71
        %s430 = smul.u32 16, %s27
        %p431 = scmp.lt.s32.totalorder %s430, 47
        %s432 = scalar_select %p431, %s430, 47
        %s433 = smul.addr %s432, 4
        %s434 = scalar_lea.vmem %s2, %s433
        %p435 = pneg %p100
        %p436 = pneg %p97
        %s437 = smul.u32 16, %s27
        %p438 = scmp.lt.s32.totalorder %s437, 47
        %s439 = scalar_select %p438, %s437, 47
        %s440 = smul.addr %s439, 4
        %s441 = scalar_lea.vmem %s3, %s440
        %p442 = pneg %p126
        %p443 = pneg %p123
        %p444 = pneg %p147
        %p445 = pneg %p144
        %p446 = pneg %p168
        %p447 = pneg %p165
        %p448 = pneg %p189
        %p449 = pneg %p186
        %p450 = pneg %p210
        %p451 = pneg %p207
        %p452 = pneg %p231
        %p453 = pneg %p228
        %p454 = pneg %p252
        %p455 = pneg %p249
        %p456 = pneg %p273
        %p457 = pneg %p270
        %p458 = pneg %p294
        %p459 = pneg %p291
        %p460 = pneg %p315
        %p461 = pneg %p312
        %p462 = pneg %p336
        %p463 = pneg %p333
        %p464 = scmp.lt.s32.totalorder %s27, 2
        %s465 = scalar_select %p464, %s27, 2
        %s466 = smul.addr %s465, 8
        %s467 = scalar_lea.vmem %s0, %s466
        %p468 = scmp.lt.s32.totalorder %s27, 2
        %s469 = scalar_select %p468, %s27, 2
        %s470 = smul.addr %s469, 8
        %s471 = scalar_lea.vmem %s1, %s470
        %s472 = smul.u32 16, %s27
        %p473 = scmp.lt.s32.totalorder %s472, 47
        %s474 = scalar_select %p473, %s472, 47
        %s475 = smul.addr %s474, 4
        %s476 = scalar_lea.vmem %s2, %s475
        %s477 = smul.u32 16, %s27
        %s478 = smul.u32 16, %s27
        %p479 = scmp.lt.s32.totalorder %s478, 47
        %s480 = scalar_select %p479, %s478, 47
        %s481 = smul.addr %s480, 4
        %s482 = scalar_lea.vmem %s3, %s481
        %s483 = smul.u32 16, %s27
        %p485 = scmp.eq.s32.totalorder %s27, 0
        // Predicated region
        $region69: #{tpu_custom_call.1} parent=67 // pred_check
          %p486 = pneg %p485
        $region70: #{tpu_custom_call.1} parent=67 // pred_check_branch
          %488 = sbr.rel (%p486) target = $region72
        $region71: #{tpu_custom_call.1} parent=67 // pred_region
          %vm489 = vcmask 392192
          %490 = vst.msk [vmem:[#allocation2] sm:$0xff] %vm489, 0.0
          %491 = vst.msk [vmem:[#allocation3] sm:$0xff] %vm489, 0.0
        $region72: #{tpu_custom_call.1} parent=67 // pred_fallthru
          _
        %v492 = vld [vmem:[%s467] sm:$0xff]
        %v493 = vld [vmem:[%s471] sm:$0xff]
        %s494 = smul.u32 %s27, 128
        %v495 = vlaneseq
        %v496 = vand.u32 %v495, 127
        %v497 = vstv %s494
        %v498 = vadd.s32 %v497, %v496
        %vm499 = vcmp.lt.s32.totalorder %v498, 300
        %v500 = vsel %vm499, %v492, 0.0
        %v501 = vsel %vm499, %v493, 0.0
        %v502 = vld [vmem:[#allocation2] sm:$0xff]
        %v503 = vpack.c.bf16 %v500, %v500
        %v504 = vld [vmem:[%s476] sm:$0xf]
        %v505 = vld [vmem:[%s476 + $0x4] sm:$0xf]
        %v506 = vld [vmem:[%s476 + $0x8] sm:$0xf]
        %v507 = vld [vmem:[%s476 + $0xc] sm:$0xf]
        %v508 = vld [vmem:[%s476 + $0x10] sm:$0xf]
        %v509 = vld [vmem:[%s476 + $0x14] sm:$0xf]
        %v510 = vld [vmem:[%s476 + $0x18] sm:$0xf]
        %v511 = vld [vmem:[%s476 + $0x1c] sm:$0xf]
        %v512 = vld [vmem:[%s476 + $0x20] sm:$0xf]
        %v513 = vld [vmem:[%s476 + $0x24] sm:$0xf]
        %v514 = vld [vmem:[%s476 + $0x28] sm:$0xf]
        %v515 = vld [vmem:[%s476 + $0x2c] sm:$0xf]
        %v516 = vld [vmem:[%s476 + $0x30] sm:$0xf]
        %v517 = vld [vmem:[%s476 + $0x34] sm:$0xf]
        %v518 = vld [vmem:[%s476 + $0x38] sm:$0xf]
        %v519 = vld [vmem:[%s476 + $0x3c] sm:$0xf]
        %v536 = vunpack.c.l.b16 %v504
        %v537 = vunpack.c.l.b16 %v505
        %v538 = vunpack.c.l.b16 %v506
        %v539 = vunpack.c.l.b16 %v507
        %v540 = vunpack.c.l.b16 %v508
        %v541 = vunpack.c.l.b16 %v509
        %v542 = vunpack.c.l.b16 %v510
        %v543 = vunpack.c.l.b16 %v511
        %v544 = vunpack.c.l.b16 %v512
        %v545 = vunpack.c.l.b16 %v513
        %v546 = vunpack.c.l.b16 %v514
        %v547 = vunpack.c.l.b16 %v515
        %v548 = vunpack.c.l.b16 %v516
        %v549 = vunpack.c.l.b16 %v517
        %v550 = vunpack.c.l.b16 %v518
        %v551 = vunpack.c.l.b16 %v519
        %v552 = vpack.c.b16 %v537, %v536
        %v553 = vpack.c.b16 %v539, %v538
        %v554 = vpack.c.b16 %v541, %v540
        %v555 = vpack.c.b16 %v543, %v542
        %v556 = vpack.c.b16 %v545, %v544
        %v557 = vpack.c.b16 %v547, %v546
        %v558 = vpack.c.b16 %v549, %v548
        %v559 = vpack.c.b16 %v551, %v550
        %568 = vmatprep.subr.bf16.mxu0 0
        %569 = vmatpush1.bf16.msra.mxu0 %v552
        %570 = vmatprep.subr.bf16.mxu0 0
        %571 = vmatpush1.bf16.msra.mxu0 %v553
        %572 = vmatprep.subr.bf16.mxu0 0
        %573 = vmatpush1.bf16.msra.mxu0 %v554
        %574 = vmatprep.subr.bf16.mxu0 0
        %575 = vmatpush1.bf16.msra.mxu0 %v555
        %576 = vmatprep.subr.bf16.mxu0 0
        %577 = vmatpush1.bf16.msra.mxu0 %v556
        %578 = vmatprep.subr.bf16.mxu0 0
        %579 = vmatpush1.bf16.msra.mxu0 %v557
        %580 = vmatprep.subr.bf16.mxu0 0
        %581 = vmatpush1.bf16.msra.mxu0 %v558
        %582 = vmatprep.subr.bf16.mxu0 0
        %583 = vmatpush1.bf16.msra.mxu0 %v559
        %584 = vmatprep.subr.bf16.mxu0 0
        %585 = vmatpush1.bf16.msra.mxu0 0
        %586 = vmatprep.subr.bf16.mxu0 0
        %587 = vmatpush1.bf16.msra.mxu0 0
        %588 = vmatprep.subr.bf16.mxu0 0
        %589 = vmatpush1.bf16.msra.mxu0 0
        %590 = vmatprep.subr.bf16.mxu0 0
        %591 = vmatpush1.bf16.msra.mxu0 0
        %592 = vmatprep.subr.bf16.mxu0 0
        %593 = vmatpush1.bf16.msra.mxu0 0
        %594 = vmatprep.subr.bf16.mxu0 0
        %595 = vmatpush1.bf16.msra.mxu0 0
        %596 = vmatprep.subr.bf16.mxu0 0
        %597 = vmatpush1.bf16.msra.mxu0 0
        %598 = vmatprep.subr.bf16.mxu0 0
        %599 = vmatpush1.bf16.msra.mxu0 0
        %600 = vmatprep.mubr.bf16.mxu0 0
        %601 = vmatmul.mubr.bf16.gmra.mrb[0].mxu0 %v503
        %v602 = vpop.f32.mrb[0].mxu0
        %v603 = vadd.f32 0.0, %v602
        %v604 = vpop.f32.mrb[0].mxu0
        %v605 = vpop.f32.mrb[0].mxu0
        %v606 = vpop.f32.mrb[0].mxu0
        %607 = vdwg.mxu0
        %v608 = vadd.f32 %v502, %v603
        %vm609 = vcmask 392192
        %610 = vst.msk [vmem:[#allocation2] sm:$0xff] %vm609, %v608
        %v611 = vld [vmem:[#allocation3] sm:$0xff]
        %v612 = vpack.c.bf16 %v501, %v501
        %v613 = vld [vmem:[%s482] sm:$0xf]
        %v614 = vld [vmem:[%s482 + $0x4] sm:$0xf]
        %v615 = vld [vmem:[%s482 + $0x8] sm:$0xf]
        %v616 = vld [vmem:[%s482 + $0xc] sm:$0xf]
        %v617 = vld [vmem:[%s482 + $0x10] sm:$0xf]
        %v618 = vld [vmem:[%s482 + $0x14] sm:$0xf]
        %v619 = vld [vmem:[%s482 + $0x18] sm:$0xf]
        %v620 = vld [vmem:[%s482 + $0x1c] sm:$0xf]
        %v621 = vld [vmem:[%s482 + $0x20] sm:$0xf]
        %v622 = vld [vmem:[%s482 + $0x24] sm:$0xf]
        %v623 = vld [vmem:[%s482 + $0x28] sm:$0xf]
        %v624 = vld [vmem:[%s482 + $0x2c] sm:$0xf]
        %v625 = vld [vmem:[%s482 + $0x30] sm:$0xf]
        %v626 = vld [vmem:[%s482 + $0x34] sm:$0xf]
        %v627 = vld [vmem:[%s482 + $0x38] sm:$0xf]
        %v628 = vld [vmem:[%s482 + $0x3c] sm:$0xf]
        %v645 = vunpack.c.l.b16 %v613
        %v646 = vunpack.c.l.b16 %v614
        %v647 = vunpack.c.l.b16 %v615
        %v648 = vunpack.c.l.b16 %v616
        %v649 = vunpack.c.l.b16 %v617
        %v650 = vunpack.c.l.b16 %v618
        %v651 = vunpack.c.l.b16 %v619
        %v652 = vunpack.c.l.b16 %v620
        %v653 = vunpack.c.l.b16 %v621
        %v654 = vunpack.c.l.b16 %v622
        %v655 = vunpack.c.l.b16 %v623
        %v656 = vunpack.c.l.b16 %v624
        %v657 = vunpack.c.l.b16 %v625
        %v658 = vunpack.c.l.b16 %v626
        %v659 = vunpack.c.l.b16 %v627
        %v660 = vunpack.c.l.b16 %v628
        %v661 = vpack.c.b16 %v646, %v645
        %v662 = vpack.c.b16 %v648, %v647
        %v663 = vpack.c.b16 %v650, %v649
        %v664 = vpack.c.b16 %v652, %v651
        %v665 = vpack.c.b16 %v654, %v653
        %v666 = vpack.c.b16 %v656, %v655
        %v667 = vpack.c.b16 %v658, %v657
        %v668 = vpack.c.b16 %v660, %v659
        %677 = vmatprep.subr.bf16.mxu0 0
        %678 = vmatpush1.bf16.msra.mxu0 %v661
        %679 = vmatprep.subr.bf16.mxu0 0
        %680 = vmatpush1.bf16.msra.mxu0 %v662
        %681 = vmatprep.subr.bf16.mxu0 0
        %682 = vmatpush1.bf16.msra.mxu0 %v663
        %683 = vmatprep.subr.bf16.mxu0 0
        %684 = vmatpush1.bf16.msra.mxu0 %v664
        %685 = vmatprep.subr.bf16.mxu0 0
        %686 = vmatpush1.bf16.msra.mxu0 %v665
        %687 = vmatprep.subr.bf16.mxu0 0
        %688 = vmatpush1.bf16.msra.mxu0 %v666
        %689 = vmatprep.subr.bf16.mxu0 0
        %690 = vmatpush1.bf16.msra.mxu0 %v667
        %691 = vmatprep.subr.bf16.mxu0 0
        %692 = vmatpush1.bf16.msra.mxu0 %v668
        %693 = vmatprep.subr.bf16.mxu0 0
        %694 = vmatpush1.bf16.msra.mxu0 0
        %695 = vmatprep.subr.bf16.mxu0 0
        %696 = vmatpush1.bf16.msra.mxu0 0
        %697 = vmatprep.subr.bf16.mxu0 0
        %698 = vmatpush1.bf16.msra.mxu0 0
        %699 = vmatprep.subr.bf16.mxu0 0
        %700 = vmatpush1.bf16.msra.mxu0 0
        %701 = vmatprep.subr.bf16.mxu0 0
        %702 = vmatpush1.bf16.msra.mxu0 0
        %703 = vmatprep.subr.bf16.mxu0 0
        %704 = vmatpush1.bf16.msra.mxu0 0
        %705 = vmatprep.subr.bf16.mxu0 0
        %706 = vmatpush1.bf16.msra.mxu0 0
        %707 = vmatprep.subr.bf16.mxu0 0
        %708 = vmatpush1.bf16.msra.mxu0 0
        %709 = vmatprep.mubr.bf16.mxu0 0
        %710 = vmatmul.mubr.bf16.gmra.mrb[0].mxu0 %v612
        %v711 = vpop.f32.mrb[0].mxu0
        %v712 = vadd.f32 0.0, %v711
        %v713 = vpop.f32.mrb[0].mxu0
        %v714 = vpop.f32.mrb[0].mxu0
        %v715 = vpop.f32.mrb[0].mxu0
        %716 = vdwg.mxu0
        %v717 = vadd.f32 %v611, %v712
        %718 = vst.msk [vmem:[#allocation3] sm:$0xff] %vm609, %v717
        %p719 = scmp.eq.s32.totalorder %s27, 2
        // Predicated region
        $region73: #{tpu_custom_call.1} parent=67 // pred_check
          %p720 = pneg %p719
        $region74: #{tpu_custom_call.1} parent=67 // pred_check_branch
          %722 = sbr.rel (%p720) target = $region76
        $region75: #{tpu_custom_call.1} parent=67 // pred_region
          %v723 = vld [vmem:[%s10] sm:$0xf]
          %v724 = vld [vmem:[%s10 + $0x4] sm:$0xf]
          %v725 = vld [vmem:[%s10 + $0x8] sm:$0xf]
          %v726 = vld [vmem:[%s10 + $0xc] sm:$0xf]
          %v727 = vld [vmem:[%s10 + $0x10] sm:$0xf]
          %v728 = vld [vmem:[%s10 + $0x14] sm:$0xf]
          %v729 = vld [vmem:[%s11] sm:$0x1]
          %v730 = vld [vmem:[#allocation2] sm:$0xff]
          %v731 = vld [vmem:[%s4] sm:$0x1]
          %v732 = vld [vmem:[%s6] sm:$0x1]
          %v733 = vld [vmem:[%s8] sm:$0x1]
          %v735 = vlaneseq
          %v736 = vshrl.u32 %v735, 7
          %v737 = vsub.s32 0, %v736
          %v738 = vrot.slane %v731, %v737
          %v740 = vadd.f32 %v730, %v738
          %v741 = vtanh.pop %v740
          %v742 = vsel %vm609, %v741, 0.0
          %v743 = vrot.slane %v742, 4
          %v744 = vadd.f32 %v742, %v743
          %v745 = vrot.slane %v744, 2
          %v746 = vadd.f32 %v744, %v745
          %v747 = vrot.slane %v746, 1
          %v748 = vadd.f32 %v746, %v747
          %v749 = vrcp.pop 8.0
          %v750 = vmul.f32 %v748, %v749
          %v751 = vsub.f32 %v741, %v750
          %v752 = vmul.f32 %v751, %v751
          %v753 = vsel %vm609, %v752, 0.0
          %v754 = vrot.slane %v753, 4
          %v755 = vadd.f32 %v753, %v754
          %v756 = vrot.slane %v755, 2
          %v757 = vadd.f32 %v755, %v756
          %v758 = vrot.slane %v757, 1
          %v759 = vadd.f32 %v757, %v758
          %v760 = vmul.f32 %v759, %v749
          %v761 = vadd.f32 %v760, 1e-05
          %v762 = vrsqrt.pop %v761
          %v763 = vmul.f32 %v732, %v762
          %v764 = vmul.f32 %v750, %v763
          %v765 = vsub.f32 %v733, %v764
          %v767 = vlaneseq
          %v768 = vshrl.u32 %v767, 7
          %v769 = vsub.s32 0, %v768
          %v770 = vrot.slane %v763, %v769
          %v772 = vmul.f32 %v741, %v770
          %v774 = vlaneseq
          %v775 = vshrl.u32 %v774, 7
          %v776 = vsub.s32 0, %v775
          %v777 = vrot.slane %v765, %v776
          %v779 = vadd.f32 %v772, %v777
          %v780 = vpack.c.bf16 %v779, %v779
          %v782 = vlaneseq
          %v783 = vshrl.u32 %v782, 7
          %v784 = vsub.s32 0, %v783
          %v785 = vrot.slane %v729, %v784
          %v793 = vunpack.c.l.b16 %v723
          %v794 = vunpack.c.l.b16 %v724
          %v795 = vunpack.c.l.b16 %v725
          %v796 = vunpack.c.l.b16 %v726
          %v797 = vunpack.c.l.b16 %v727
          %v798 = vunpack.c.l.b16 %v728
          %v799 = vpack.c.b16 %v794, %v793
          %v800 = vpack.c.b16 %v796, %v795
          %v801 = vpack.c.b16 %v798, %v797
          %v806 = vsel %vm609, %v780, 0
          %808 = vmatprep.subr.bf16.mxu0 0
          %809 = vmatpush1.bf16.msra.mxu0 %v799
          %810 = vmatprep.subr.bf16.mxu0 0
          %811 = vmatpush1.bf16.msra.mxu0 %v800
          %812 = vmatprep.subr.bf16.mxu0 0
          %813 = vmatpush1.bf16.msra.mxu0 %v801
          %814 = vmatprep.subr.bf16.mxu0 0
          %815 = vmatpush1.bf16.msra.mxu0 0
          %816 = vmatprep.subr.bf16.mxu0 0
          %817 = vmatpush1.bf16.msra.mxu0 0
          %818 = vmatprep.subr.bf16.mxu0 0
          %819 = vmatpush1.bf16.msra.mxu0 0
          %820 = vmatprep.subr.bf16.mxu0 0
          %821 = vmatpush1.bf16.msra.mxu0 0
          %822 = vmatprep.subr.bf16.mxu0 0
          %823 = vmatpush1.bf16.msra.mxu0 0
          %824 = vmatprep.subr.bf16.mxu0 0
          %825 = vmatpush1.bf16.msra.mxu0 0
          %826 = vmatprep.subr.bf16.mxu0 0
          %827 = vmatpush1.bf16.msra.mxu0 0
          %828 = vmatprep.subr.bf16.mxu0 0
          %829 = vmatpush1.bf16.msra.mxu0 0
          %830 = vmatprep.subr.bf16.mxu0 0
          %831 = vmatpush1.bf16.msra.mxu0 0
          %832 = vmatprep.subr.bf16.mxu0 0
          %833 = vmatpush1.bf16.msra.mxu0 0
          %834 = vmatprep.subr.bf16.mxu0 0
          %835 = vmatpush1.bf16.msra.mxu0 0
          %836 = vmatprep.subr.bf16.mxu0 0
          %837 = vmatpush1.bf16.msra.mxu0 0
          %838 = vmatprep.subr.bf16.mxu0 0
          %839 = vmatpush1.bf16.msra.mxu0 0
          %840 = vmatprep.mubr.bf16.mxu0 0
          %841 = vmatmul.mubr.bf16.gmra.mrb[0].mxu0 %v806
          %v842 = vpop.f32.mrb[0].mxu0
          %v843 = vadd.f32 %v785, %v842
          %v844 = vpop.f32.mrb[0].mxu0
          %v845 = vpop.f32.mrb[0].mxu0
          %v846 = vpop.f32.mrb[0].mxu0
          %847 = vdwg.mxu0
          %848 = vst [vmem:[#allocation4] sm:$0xff] %v843
          %v849 = vld [vmem:[#allocation3] sm:$0xff]
          %v850 = vld [vmem:[%s5] sm:$0x1]
          %v851 = vld [vmem:[%s7] sm:$0x1]
          %v852 = vld [vmem:[%s9] sm:$0x1]
          %v854 = vlaneseq
          %v855 = vshrl.u32 %v854, 7
          %v856 = vsub.s32 0, %v855
          %v857 = vrot.slane %v850, %v856
          %v859 = vadd.f32 %v849, %v857
          %v860 = vtanh.pop %v859
          %v861 = vsel %vm609, %v860, 0.0
          %v862 = vrot.slane %v861, 4
          %v863 = vadd.f32 %v861, %v862
          %v864 = vrot.slane %v863, 2
          %v865 = vadd.f32 %v863, %v864
          %v866 = vrot.slane %v865, 1
          %v867 = vadd.f32 %v865, %v866
          %v868 = vmul.f32 %v867, %v749
          %v869 = vsub.f32 %v860, %v868
          %v870 = vmul.f32 %v869, %v869
          %v871 = vsel %vm609, %v870, 0.0
          %v872 = vrot.slane %v871, 4
          %v873 = vadd.f32 %v871, %v872
          %v874 = vrot.slane %v873, 2
          %v875 = vadd.f32 %v873, %v874
          %v876 = vrot.slane %v875, 1
          %v877 = vadd.f32 %v875, %v876
          %v878 = vmul.f32 %v877, %v749
          %v879 = vadd.f32 %v878, 1e-05
          %v880 = vrsqrt.pop %v879
          %v881 = vmul.f32 %v851, %v880
          %v882 = vmul.f32 %v868, %v881
          %v883 = vsub.f32 %v852, %v882
          %v885 = vlaneseq
          %v886 = vshrl.u32 %v885, 7
          %v887 = vsub.s32 0, %v886
          %v888 = vrot.slane %v881, %v887
          %v890 = vmul.f32 %v860, %v888
          %v892 = vlaneseq
          %v893 = vshrl.u32 %v892, 7
          %v894 = vsub.s32 0, %v893
          %v895 = vrot.slane %v883, %v894
          %v897 = vadd.f32 %v890, %v895
          %v898 = vpack.c.bf16 %v897, %v897
          %v900 = vsel %vm609, %v898, 0
          %902 = vmatprep.subr.bf16.mxu0 0
          %903 = vmatpush1.bf16.msra.mxu0 %v799
          %904 = vmatprep.subr.bf16.mxu0 0
          %905 = vmatpush1.bf16.msra.mxu0 %v800
          %906 = vmatprep.subr.bf16.mxu0 0
          %907 = vmatpush1.bf16.msra.mxu0 %v801
          %908 = vmatprep.subr.bf16.mxu0 0
          %909 = vmatpush1.bf16.msra.mxu0 0
          %910 = vmatprep.subr.bf16.mxu0 0
          %911 = vmatpush1.bf16.msra.mxu0 0
          %912 = vmatprep.subr.bf16.mxu0 0
          %913 = vmatpush1.bf16.msra.mxu0 0
          %914 = vmatprep.subr.bf16.mxu0 0
          %915 = vmatpush1.bf16.msra.mxu0 0
          %916 = vmatprep.subr.bf16.mxu0 0
          %917 = vmatpush1.bf16.msra.mxu0 0
          %918 = vmatprep.subr.bf16.mxu0 0
          %919 = vmatpush1.bf16.msra.mxu0 0
          %920 = vmatprep.subr.bf16.mxu0 0
          %921 = vmatpush1.bf16.msra.mxu0 0
          %922 = vmatprep.subr.bf16.mxu0 0
          %923 = vmatpush1.bf16.msra.mxu0 0
          %924 = vmatprep.subr.bf16.mxu0 0
          %925 = vmatpush1.bf16.msra.mxu0 0
          %926 = vmatprep.subr.bf16.mxu0 0
          %927 = vmatpush1.bf16.msra.mxu0 0
          %928 = vmatprep.subr.bf16.mxu0 0
          %929 = vmatpush1.bf16.msra.mxu0 0
          %930 = vmatprep.subr.bf16.mxu0 0
          %931 = vmatpush1.bf16.msra.mxu0 0
          %932 = vmatprep.subr.bf16.mxu0 0
          %933 = vmatpush1.bf16.msra.mxu0 0
          %934 = vmatprep.mubr.bf16.mxu0 0
          %935 = vmatmul.mubr.bf16.gmra.mrb[0].mxu0 %v900
          %v936 = vpop.f32.mrb[0].mxu0
          %v937 = vadd.f32 %v785, %v936
          %v938 = vpop.f32.mrb[0].mxu0
          %v939 = vpop.f32.mrb[0].mxu0
          %v940 = vpop.f32.mrb[0].mxu0
          %941 = vdwg.mxu0
          %942 = vst [vmem:[#allocation6] sm:$0xff] %v937
        $region76: #{tpu_custom_call.1} parent=67 // pred_fallthru
          _
        // Predicated region
        $region77: #{tpu_custom_call.1} parent=67 // pred_check
          %p943 = pneg %p312
        $region78: #{tpu_custom_call.1} parent=67 // pred_check_branch
          %945 = sbr.rel (%p943) target = $region80
        $region79: #{tpu_custom_call.1} parent=67 // pred_region
          %s947 = ssub.s32 128, 128
          %948 = vsyncadd [#allocation5], %s947
          %s950 = sshll.u32 [#allocation4], 4
          %s951 = int_to_ptr.vmem [resolvable:$true] %s950
          %953 = dma.vmem_to_hbm [thread:$0]  %s951, 128, %s12, [#allocation5]
        $region80: #{tpu_custom_call.1} parent=67 // pred_fallthru
          _
        // Predicated region
        $region81: #{tpu_custom_call.1} parent=67 // pred_check
          %p954 = pneg %p333
        $region82: #{tpu_custom_call.1} parent=67 // pred_check_branch
          %956 = sbr.rel (%p954) target = $region84
        $region83: #{tpu_custom_call.1} parent=67 // pred_region
          %s958 = ssub.s32 128, 128
          %959 = vsyncadd [#allocation7], %s958
          %s961 = sshll.u32 [#allocation6], 4
          %s962 = int_to_ptr.vmem [resolvable:$true] %s961
          %964 = dma.vmem_to_hbm [thread:$0]  %s962, 128, %s13, [#allocation7]
        $region84: #{tpu_custom_call.1} parent=67 // pred_fallthru
          _
        // Predicated region
        $region85: #{tpu_custom_call.1} parent=67 // pred_check
          %p965 = pneg %p312
        $region86: #{tpu_custom_call.1} parent=67 // pred_check_branch
          %967 = sbr.rel (%p965) target = $region88
        $region87: #{tpu_custom_call.1} parent=67 // pred_region
          %968 = dma.done [#allocation5], 128
        $region88: #{tpu_custom_call.1} parent=67 // pred_fallthru
          _
        // Predicated region
        $region89: #{tpu_custom_call.1} parent=67 // pred_check
          %p969 = pneg %p333
        $region90: #{tpu_custom_call.1} parent=67 // pred_check_branch
          %971 = sbr.rel (%p969) target = $region92
        $region91: #{tpu_custom_call.1} parent=67 // pred_region
          %972 = dma.done [#allocation7], 128
        $region92: #{tpu_custom_call.1} parent=67 // pred_fallthru
          _
      $region68: #{tpu_custom_call.1} parent=5 // pred_fallthru
        _
      %p973 = scmp.le.s32.totalorder 2, %s22
      // Predicated region
      $region93: #{tpu_custom_call.1} parent=5 // pred_check
        %p974 = pneg %p973
      $region94: #{tpu_custom_call.1} parent=5 // pred_check_branch
        %976 = sbr.rel (%p974) target = $region96
      $region95: #{tpu_custom_call.1} parent=5 // pred_region
        %s977 = ssub.s32 %s22, 2
      $region96: #{tpu_custom_call.1} parent=5 // pred_fallthru
        _
    $region6: #{tpu_custom_call.1} parent=1 // loop_footer
      %s26 = sadd.s32 1, %s22
    $region7: #{tpu_custom_call.1} parent=1 // loop_footer_branch
      %21 = sbr.rel target = $region3
    $region8: #{tpu_custom_call.1} parent=1 // loop_exit
      _
    %978 = vsyncpa [#allocation5], 1
    %s979 = scalar_lea.sflag [#allocation5], 1
    %980 = vsyncpa %s979, 1
    %981 = vsyncpa [#allocation7], 1

</llo_original>
